<compile_context>
chip_gen: v6e
topology: v6e:2x2x1
jax: 0.10.0
libtpu: 0.0.40
codegen_flags: <defaults>
</compile_context>

<pallas_src>
import functools
import math

import jax
import jax.numpy as jnp
from jax.experimental import pallas as pl
from jax.experimental.pallas import tpu as pltpu


# -----------------------------------------------------------------------------
# pe table (identical to the PyTorch __init__), built once at module creation.
# -----------------------------------------------------------------------------
def _build_pe_table_2d(d_model: int, max_len: int = 3000) -> jnp.ndarray:
    assert d_model % 2 == 0, "PositionalEncoding assumes an even d_model"
    position = jnp.arange(0, max_len, dtype=jnp.float32)[:, None]            # (L, 1)
    div_term = jnp.exp(
        jnp.arange(0, d_model, 2, dtype=jnp.float32) * (-math.log(10000.0) / d_model)
    )                                                                         # (D/2,)
    angles = position * div_term                                              # (L, D/2)
    pe = jnp.zeros((max_len, d_model), dtype=jnp.float32)
    pe = pe.at[:, 0::2].set(jnp.sin(angles))
    pe = pe.at[:, 1::2].set(jnp.cos(angles))
    return pe                                                                 # (L, D)


# -----------------------------------------------------------------------------
# sizing helpers
# -----------------------------------------------------------------------------
def _round_up(x: int, m: int) -> int:
    return -(-x // m) * m


def _sublane_multiple(dtype) -> int:
    # Packed sublane tile: 8 rows of 32-bit words -> 8 (f32) / 16 (bf16) / 32 (int8).
    return 8 * max(1, 4 // jnp.dtype(dtype).itemsize)


def _vmem_budget_bytes():
    """Generation-aware per-step double-buffered working-set budget."""
    cap = 64 * 1024 * 1024
    try:
        cap = int(pltpu.get_tpu_info().vmem_capacity_bytes)
    except Exception:
        pass
    # ~10 MiB on v7x (64 MiB VMEM), ~21 MiB on v5e/v6e (128 MiB VMEM).
    budget = int(min(max(cap // 6, 4 * 1024 * 1024), 24 * 1024 * 1024))
    return budget, cap


def _pick_vmem_limit(working_set: int, budget: int, cap: int) -> int:
    limit = max(32 * 1024 * 1024, 3 * budget, working_set + 8 * 1024 * 1024)
    return int(min(limit, max(32 * 1024 * 1024, cap - 8 * 1024 * 1024)))


def _choose_tile_seq(seq: int, bytes_per_row: int, row_multiple: int, budget: int) -> int:
    """Seq tile: fits the VMEM budget, multiple of `row_multiple`, and targets
    >= 4 grid steps when seq allows (v7x two-TC split + pipeline overlap)."""
    seq_pad = _round_up(seq, row_multiple)
    rows_cap = (budget // max(1, bytes_per_row)) // row_multiple * row_multiple
    rows_cap = max(row_multiple, rows_cap)
    max_tiles = max(1, seq_pad // row_multiple)
    n_tiles = max(min(4, max_tiles), -(-seq_pad // rows_cap))
    tile_s = _round_up(-(-seq // n_tiles), row_multiple)
    return int(min(tile_s, seq_pad))


# -----------------------------------------------------------------------------
# kernels
# -----------------------------------------------------------------------------
def _pe_add_lane_folded_kernel(x_ref, pe_ref, o_ref, *, batch):
    # x_ref: (tile_s, batch*d_model); pe_ref: (tile_s, d_model).
    # Replicating pe along the lane axis (cheap vreg duplication; the VPU is
    # otherwise idle) realises the batch broadcast while keeping loads and
    # stores lane- and sublane-dense.
    o_ref[...] = (x_ref[...] + jnp.tile(pe_ref[...], (1, batch))).astype(o_ref.dtype)


def _pe_add_batch_bcast_kernel(x_ref, pe_ref, o_ref):
    # x_ref: (tile_s, tile_b, d_model); pe_ref: (tile_s, 1, d_model) ->
    # native size-1 broadcast over the sublane-dense batch dim.
    o_ref[...] = (x_ref[...] + pe_ref[...]).astype(o_ref.dtype)


# -----------------------------------------------------------------------------
# dispatch
# -----------------------------------------------------------------------------
def _positional_encoding_call(x, pe2d, pe3d, *, tile_s=None, tile_b=None):
    seq, batch, d_model = x.shape
    max_len = pe2d.shape[0]
    assert pe2d.shape == (max_len, d_model)
    assert seq <= max_len, "sequence longer than the positional-encoding table"

    x_item = jnp.dtype(x.dtype).itemsize
    pe_item = jnp.dtype(pe2d.dtype).itemsize
    sub = _sublane_multiple(x.dtype)
    budget, vmem_cap = _vmem_budget_bytes()

    if batch < sub:
        # ---- small batch: fold batch into lanes (lane-dense path) ------------
        row = batch * d_model
        x2 = x.reshape(seq, row)                  # free view: collapse trailing dims
        # Per seq row, per grid step: x in + out double-buffered (4x) + add
        # temporary (1x) + pe double-buffered (2x); lane dims padded to 128.
        bytes_per_row = (5 * _round_up(row, 128) * x_item
                         + 2 * _round_up(d_model, 128) * pe_item)
        if tile_s is None:
            tile_s = _choose_tile_seq(seq, bytes_per_row, sub, budget)
        tile_s = int(max(1, min(tile_s, _round_up(seq, sub))))

        pe_in = pe2d
        if seq < 8:
            # Blocks below the (8,128) rule must equal the full array dims; for
            # a tiny seq use single full-array blocks (the pe slice is trivial).
            tile_s, pe_in = seq, pe2d[:seq]
        else:
            tile_s = _round_up(tile_s, sub)

        working_set = tile_s * bytes_per_row
        vmem_limit = _pick_vmem_limit(working_set, budget, vmem_cap)
        n_tiles = pl.cdiv(seq, tile_s)

        out2 = pl.pallas_call(
            functools.partial(_pe_add_lane_folded_kernel, batch=batch),
            out_shape=jax.ShapeDtypeStruct((seq, row), x.dtype),
            grid_spec=pltpu.PrefetchScalarGridSpec(
                num_scalar_prefetch=0,
                grid=(n_tiles,),
                in_specs=[
                    pl.BlockSpec((tile_s, row), lambda i: (i, 0)),
                    pl.BlockSpec((tile_s, d_model), lambda i: (i, 0)),
                ],
                out_specs=pl.BlockSpec((tile_s, row), lambda i: (i, 0)),
            ),
            compiler_params=pltpu.CompilerParams(
                dimension_semantics=("parallel",),
                vmem_limit_bytes=vmem_limit,
            ),
        )(x2, pe_in)
        return out2.reshape(seq, batch, d_model)

    # ---- large batch: 3-D blocks, grid over (seq, batch) ----------------------
    d_lanes = _round_up(d_model, 128)

    def bytes_per_row_3d(tb):
        return (5 * _round_up(tb, sub) * d_lanes * x_item
                + 2 * sub * d_lanes * pe_item)

    if tile_b is None:
        tile_b = batch
        # Guard huge batch*d_model: shrink the batch block until a minimal
        # 8-row seq tile fits the budget instead of blowing the VMEM limit.
        while tile_b > sub and 8 * bytes_per_row_3d(tile_b) > budget:
            tile_b = max(sub, (tile_b // 2) // sub * sub)
    tile_b = int(min(max(1, tile_b), batch))
    if tile_b != batch:
        tile_b = max(sub, (tile_b // sub) * sub)   # (8,128) rule: multiple of sublanes

    if tile_s is None:
        tile_s = _choose_tile_seq(seq, bytes_per_row_3d(tile_b), 8, budget)
    tile_s = int(max(1, min(tile_s, seq)))

    working_set = tile_s * bytes_per_row_3d(tile_b)
    vmem_limit = _pick_vmem_limit(working_set, budget, vmem_cap)
    grid = (pl.cdiv(seq, tile_s), pl.cdiv(batch, tile_b))

    return pl.pallas_call(
        _pe_add_batch_bcast_kernel,
        out_shape=jax.ShapeDtypeStruct((seq, batch, d_model), x.dtype),
        grid_spec=pltpu.PrefetchScalarGridSpec(
            num_scalar_prefetch=0,
            grid=grid,
            # The batch grid axis iterates fastest, so the pe block index is
            # unchanged across it -> pe is DMA'd once per seq tile.
            in_specs=[
                pl.BlockSpec((tile_s, tile_b, d_model), lambda i, j: (i, j, 0)),
                pl.BlockSpec((tile_s, 1, d_model), lambda i, j: (i, 0, 0)),
            ],
            out_specs=pl.BlockSpec((tile_s, tile_b, d_model), lambda i, j: (i, j, 0)),
        ),
        compiler_params=pltpu.CompilerParams(
            dimension_semantics=("parallel", "parallel"),
            vmem_limit_bytes=vmem_limit,
        ),
    )(x, pe3d)


class PositionalEncoding:
    """Pallas-TPU drop-in for the PyTorch PositionalEncoding module."""

    def __init__(self, d_model: int, max_len: int = 3000, dtype=jnp.float32):
        pe2d = _build_pe_table_2d(d_model, max_len).astype(dtype)
        # Built once at init; never sliced or cast per forward call.
        self.pe2d = pe2d                 # (max_len, d_model)      small-batch path
        self.pe3d = pe2d[:, None, :]     # (max_len, 1, d_model)   big-batch path / reference
        self.d_model = d_model
        self.max_len = max_len

    def __call__(self, x, *, tile_s=None, tile_b=None):
        return _positional_encoding_call(x, self.pe2d, self.pe3d,
                                         tile_s=tile_s, tile_b=tile_b)


if __name__ == "__main__":
    key = jax.random.PRNGKey(0)
    k1, k2, k3 = jax.random.split(key, 3)

    # 1) Small shape in the module's (seq, batch, d_model) layout:
    #    small-batch lane-folded path, single tile.
    seq, batch, d_model = 8, 2, 32
    posenc = PositionalEncoding(d_model)
    x = jax.random.normal(k1, (seq, batch, d_model), dtype=jnp.float32)
    out = jax.block_until_ready(posenc(x))
    ref = x + posenc.pe3d[:seq]
    assert out.shape == x.shape and out.dtype == x.dtype
    assert jnp.allclose(out, ref, atol=1e-6, rtol=1e-6)

    # 2) Small-batch path, multi-tile grid (pipelined, lane-aligned d_model).
    seq2, batch2, d_model2 = 256, 2, 128
    posenc2 = PositionalEncoding(d_model2)
    x2 = jax.random.normal(k2, (seq2, batch2, d_model2), dtype=jnp.float32)
    out2 = jax.block_until_ready(posenc2(x2))
    assert jnp.allclose(out2, x2 + posenc2.pe3d[:seq2], atol=1e-6, rtol=1e-6)

    # 3) Large-batch path with an explicit 2-D (seq, batch) grid.
    seq3, batch3, d_model3 = 128, 16, 128
    posenc3 = PositionalEncoding(d_model3)
    x3 = jax.random.normal(k3, (seq3, batch3, d_model3), dtype=jnp.float32)
    out3 = jax.block_until_ready(posenc3(x3, tile_s=32, tile_b=8))
    assert jnp.allclose(out3, x3 + posenc3.pe3d[:seq3], atol=1e-6, rtol=1e-6)

    print("KERNEL_OK")
</pallas_src>

<mosaic_0001>
module attributes {stable_mosaic.version = 11 : i64} {
  func.func @_pe_add_lane_folded_kernel(%arg0: i32, %arg1: memref<8x64xf32, #tpu.memory_space<vmem>>, %arg2: memref<8x32xf32, #tpu.memory_space<vmem>>, %arg3: memref<8x64xf32, #tpu.memory_space<vmem>>) attributes {dimension_semantics = [#tpu.dimension_semantics<parallel>], iteration_bounds = array<i64: 1>, scalar_prefetch = 0 : i64, scratch_operands = 0 : i64, tpu.core_type = #tpu.core_type<tc>, window_params = [{transform_indices = @transform_0, window_bounds = array<i64: 8, 64>}, {transform_indices = @transform_1, window_bounds = array<i64: 8, 32>}, {transform_indices = @transform_2, window_bounds = array<i64: 8, 64>}]} {
    %c0 = arith.constant 0 : index
    %c0_0 = arith.constant 0 : index
    %0 = vector.load %arg1[%c0, %c0_0] : memref<8x64xf32, #tpu.memory_space<vmem>>, vector<8x64xf32>
    %c0_1 = arith.constant 0 : index
    %c0_2 = arith.constant 0 : index
    %1 = vector.load %arg2[%c0_1, %c0_2] : memref<8x32xf32, #tpu.memory_space<vmem>>, vector<8x32xf32>
    %2 = tpu.concatenate %1, %1 in 1 : vector<8x32xf32>, vector<8x32xf32> -> vector<8x64xf32>
    %3 = arith.addf %0, %2 : vector<8x64xf32>
    %c0_3 = arith.constant 0 : index
    %c0_4 = arith.constant 0 : index
    %4 = vector.load %arg3[%c0_3, %c0_4] : memref<8x64xf32, #tpu.memory_space<vmem>>, vector<8x64xf32>
    tpu.vector_store %arg3[%c0_3, %c0_4], %3 {strides = array<i32>} : memref<8x64xf32, #tpu.memory_space<vmem>>, vector<8x64xf32>,
    return
  }
  func.func @transform_0(%arg0: i32) -> (i32, i32) {
    %c0_i32 = arith.constant 0 : i32
    %c0_i32_0 = arith.constant 0 : i32
    return %arg0, %c0_i32 : i32, i32
  }
  func.func @transform_1(%arg0: i32) -> (i32, i32) {
    %c0_i32 = arith.constant 0 : i32
    %c0_i32_0 = arith.constant 0 : i32
    return %arg0, %c0_i32 : i32, i32
  }
  func.func @transform_2(%arg0: i32) -> (i32, i32) {
    %c0_i32 = arith.constant 0 : i32
    %c0_i32_0 = arith.constant 0 : i32
    return %arg0, %c0_i32 : i32, i32
  }
}

</mosaic_0001>

<llo_original>
// kernel: tpu_custom_call.1
$region0: #{tpu_custom_call.1}
  #allocation0 [shape = 'u32[]', space=smem, size = 0x4, offset = 0x4, fixed_abs, tag = 'smem constant byte address 0x4 - core index']
  #allocation1 [shape = 'u32[144,128]{1,0:T(1,128)}', space=vmem, size = 0x12000, scoped, tag = 'internal scratch']
  %s0 = inlined_call_operand.vmem [shape: f32[8,64], index: 0, kind: input, shape index: {}]
  %s1 = inlined_call_operand.vmem [shape: f32[3000,32], index: 1, kind: input, shape index: {}]
  %s2 = inlined_call_operand.hbm [shape: f32[8,64], index: 2, kind: output, shape index: {}]
  %s3 = sld [smem:[#allocation0]]
  $region18: #{tpu_custom_call.1} parent=0
    _
  %s5 = ssub.s32 1, %s3
  %s6 = scalar_select 0, %s5, %s3
  $region1: #{tpu_custom_call.1} parent=0
    #allocation2 [shape = 'u8[4096]{0}', space=vmem, size = 0x1000, scoped, tag = 'output window, operand 0, single buffered']
    #allocation3 [shape = 's32[1]{0}', space=sflag, size = 0x4, scoped, tag = 'scoped memory for tpu_custom_call.1']
    %7 = vsyncpa [#allocation3], 0
    // Predicated region
    $region2: #{tpu_custom_call.1} parent=1 // pred_check
      _
    $region3: #{tpu_custom_call.1} parent=1 // pred_check_branch
      %9 = sbr.rel (0) target = $region5
    $region4: #{tpu_custom_call.1} parent=1 // pred_region
      _
    $region5: #{tpu_custom_call.1} parent=1 // pred_fallthru
      _
    // Predicated region
    $region6: #{tpu_custom_call.1} parent=1 // pred_check
      _
    $region7: #{tpu_custom_call.1} parent=1 // pred_check_branch
      %11 = sbr.rel (0) target = $region9
    $region8: #{tpu_custom_call.1} parent=1 // pred_region
      _
    $region9: #{tpu_custom_call.1} parent=1 // pred_fallthru
      _
    %v12 = vld [vmem:[%s0] sm:$0xff]
    %v13 = vld [vmem:[%s1] sm:$0xff]
    %15 = vrot.lane.b32.xlu0 %v13, 32
    %v16 = vpop.permute.xlu0 %15
    %vm18 = vcmask 261120
    %v19 = vsel %vm18, %v13, %v16
    %v20 = vadd.f32 %v12, %v19
    %vm21 = vcmask 523264
    %22 = vst.msk [vmem:[#allocation2] sm:$0xff] %vm21, %v20
    // Predicated region
    $region10: #{tpu_custom_call.1} parent=1 // pred_check
      _
    $region11: #{tpu_custom_call.1} parent=1 // pred_check_branch
      %24 = sbr.rel (0) target = $region13
    $region12: #{tpu_custom_call.1} parent=1 // pred_region
      %s26 = ssub.s32 128, 128
      %27 = vsyncadd [#allocation3], %s26
      %s29 = sshll.u32 [#allocation2], 4
      %s30 = int_to_ptr.vmem [resolvable:$true] %s29
      %32 = dma.vmem_to_hbm [thread:$0]  %s30, 128, %s2, [#allocation3]
    $region13: #{tpu_custom_call.1} parent=1 // pred_fallthru
      _
    // Predicated region
    $region14: #{tpu_custom_call.1} parent=1 // pred_check
      _
    $region15: #{tpu_custom_call.1} parent=1 // pred_check_branch
      %34 = sbr.rel (0) target = $region17
    $region16: #{tpu_custom_call.1} parent=1 // pred_region
      %35 = dma.done [#allocation3], 128
    $region17: #{tpu_custom_call.1} parent=1 // pred_fallthru
      _
    %36 = vsyncpa [#allocation3], 1

</llo_original>
